<compile_context>
chip_gen: v7x
topology: tpu7x:2x2x1
jax: 0.10.0
libtpu: 0.0.40
codegen_flags: <defaults>
</compile_context>

<pallas_src>
import jax
import jax.numpy as jnp
from jax.experimental import pallas as pl
from jax.experimental.pallas import tpu as pltpu

_LANE = 128
_SUBLANE = 8


def _round_up(x, m):
    return ((x + m - 1) // m) * m


def _vmem_budget_bytes():
    """~80% of physical per-core VMEM (leaves headroom for compiler scratch)."""
    try:
        cap = pltpu.get_tpu_info().vmem_capacity_bytes
    except Exception:
        cap = 128 * 1024 * 1024  # v5e/v6e default assumption
    return int(cap * 0.8)


def _latent_q_kernel(h_ref, wdq_ref, bdq_ref, wuq_ref, buq_ref, o_ref, cq_ref):
    # One (token tile i, d_out tile j) grid step.
    #   h_ref:   [TM, d_model]
    #   wdq_ref: [d_model, d_lat_p]     bdq_ref: [1, d_lat_p]
    #   wuq_ref: [d_lat_p, TN]          buq_ref: [1, TN]
    #   o_ref:   [TM, TN]
    #   cq_ref:  [TM, d_lat_p] f32 scratch -- c_Q cached across the j axis.
    j = pl.program_id(1)

    # Down-projection: compute once per token tile, reuse for every d_out tile.
    @pl.when(j == 0)
    def _():
        h = h_ref[...].astype(wdq_ref.dtype)  # no-op when dtypes already match
        c = jnp.dot(h, wdq_ref[...], preferred_element_type=jnp.float32)
        cq_ref[...] = c + bdq_ref[...]        # f32 bias add

    # Up-projection for this d_out tile (f32 accumulate, f32 bias, single cast).
    q = jnp.dot(cq_ref[...].astype(wuq_ref.dtype), wuq_ref[...],
                preferred_element_type=jnp.float32)
    o_ref[...] = (q + buq_ref[...]).astype(o_ref.dtype)


def latent_q_attention(h, wdq_t, bdq, wuq_t, buq, *, tm=512, tn=2048,
                       mxu_dtype=None):
    """q_C = (h @ wdq_t + bdq) @ wuq_t + buq as one fused Pallas kernel.

    h:      [B, S, d_model]
    wdq_t:  [d_model, d_latent]   (W_DQ.weight transposed)
    bdq:    [d_latent]
    wuq_t:  [d_latent, d_out]     (W_UQ.weight transposed)
    buq:    [d_out]
    tm:     token tile size (auto-rounded / auto-shrunk to fit VMEM).
    tn:     d_out tile size (rounded to 128).
    mxu_dtype: optional dtype (e.g. jnp.bfloat16) to cast the weights / MXU
               inputs to; None keeps the incoming dtype (exact reference math).
    """
    B, S, d_model = h.shape
    d_lat = wdq_t.shape[1]
    d_out = wuq_t.shape[1]
    T = B * S

    itemsize = jnp.dtype(h.dtype).itemsize
    # Sublane packing factor: 8 rows for f32, 16 for bf16, 32 for int8/fp8.
    pack = max(_SUBLANE, 32 // itemsize)

    # Lane-dense intermediate / output widths (weight-only padding; tiny cost).
    d_lat_p = _round_up(d_lat, _LANE)
    d_out_p = _round_up(d_out, _LANE)

    # ---- d_out tile --------------------------------------------------------
    tn = min(_round_up(tn, _LANE), d_out_p)
    grid_n = pl.cdiv(d_out_p, tn)

    # ---- token tile --------------------------------------------------------
    tm = max(pack, min(tm, _round_up(T, pack)))
    if tm >= 256:
        tm = _round_up(tm, 256)        # fill the 256x256 MXU M edge (v6e/v7x)
    elif tm >= 128:
        tm = _round_up(tm, 128)
    else:
        tm = _round_up(tm, pack)

    w_itemsize = (jnp.dtype(mxu_dtype).itemsize if mxu_dtype is not None
                  else jnp.dtype(wdq_t.dtype).itemsize)
    vmem_budget = _vmem_budget_bytes()

    def vmem_use(tm_):
        act = 2 * tm_ * d_model * itemsize            # double-buffered h tiles
        out = 2 * tm_ * tn * itemsize                 # double-buffered out tiles
        cq = tm_ * d_lat_p * 4                        # f32 c_Q scratch
        wdq = d_model * d_lat_p * w_itemsize          # single-buffered weights
        wuq = d_lat_p * tn * w_itemsize * (1 if grid_n == 1 else 2)
        bias = 2 * 4 * (d_lat_p + tn)
        return act + out + cq + wdq + wuq + bias

    while vmem_use(tm) > vmem_budget and tm > pack:
        tm = max(pack, _round_up(tm // 2, pack))

    grid_t = pl.cdiv(T, tm)            # ragged last token tile handled by Pallas

    # ---- operand preparation (no token-axis pad) ---------------------------
    h2d = h.reshape(T, d_model)
    w_dtype = mxu_dtype if mxu_dtype is not None else wdq_t.dtype
    wdq_p = jnp.pad(wdq_t, ((0, 0), (0, d_lat_p - d_lat))).astype(w_dtype)
    wuq_p = jnp.pad(wuq_t, ((0, d_lat_p - d_lat),
                            (0, d_out_p - d_out))).astype(w_dtype)
    bdq_p = jnp.pad(bdq.reshape(1, d_lat).astype(jnp.float32),
                    ((0, 0), (0, d_lat_p - d_lat)))
    buq_p = jnp.pad(buq.reshape(1, d_out).astype(jnp.float32),
                    ((0, 0), (0, d_out_p - d_out)))

    # ---- advisory cost estimate for the XLA scheduler -----------------------
    flops = 2 * T * d_model * d_lat_p + 2 * T * d_lat_p * d_out_p
    bytes_accessed = (itemsize * (T * d_model + T * d_out_p)
                      + w_itemsize * (d_model * d_lat_p + d_lat_p * d_out_p)
                      + 4 * (d_lat_p + d_out_p))
    cost = pl.CostEstimate(flops=flops, transcendentals=0,
                           bytes_accessed=bytes_accessed)

    def build(single_buffer_resident):
        # Constant-index streams: single-buffer (Buffered(1)) when supported.
        const_mode = pl.Buffered(1) if single_buffer_resident else None
        # W_UQ / buq only have a constant index when there is a single d_out
        # tile; otherwise they re-stream per j and keep default double-buffering.
        wuq_mode = const_mode if grid_n == 1 else None
        return pl.pallas_call(
            _latent_q_kernel,
            out_shape=jax.ShapeDtypeStruct((T, d_out_p), h.dtype),
            grid_spec=pltpu.PrefetchScalarGridSpec(
                num_scalar_prefetch=0,
                grid=(grid_t, grid_n),
                in_specs=[
                    # Activations: tiled over tokens -> pipelined.
                    pl.BlockSpec((tm, d_model), lambda i, j: (i, 0)),
                    # W_DQ / bdq: constant block index -> DMA'd once.
                    pl.BlockSpec((d_model, d_lat_p), lambda i, j: (0, 0),
                                 pipeline_mode=const_mode),
                    pl.BlockSpec((1, d_lat_p), lambda i, j: (0, 0),
                                 pipeline_mode=const_mode),
                    # W_UQ / buq: tiled over d_out.
                    pl.BlockSpec((d_lat_p, tn), lambda i, j: (0, j),
                                 pipeline_mode=wuq_mode),
                    pl.BlockSpec((1, tn), lambda i, j: (0, j),
                                 pipeline_mode=wuq_mode),
                ],
                out_specs=pl.BlockSpec((tm, tn), lambda i, j: (i, j)),
                scratch_shapes=[pltpu.VMEM((tm, d_lat_p), jnp.float32)],
            ),
            compiler_params=pltpu.CompilerParams(
                # Token tiles independent -> megacore sharding; d_out axis is a
                # reuse axis for the cached c_Q scratch -> "arbitrary", last.
                dimension_semantics=("parallel", "arbitrary"),
                vmem_limit_bytes=vmem_budget,
            ),
            cost_estimate=cost,
        )

    try:
        out2d = build(True)(h2d, wdq_p, bdq_p, wuq_p, buq_p)
    except Exception:
        # Fallback if this jax build rejects pipeline_mode=pl.Buffered(1):
        # default double-buffered weights (correct, just more resident VMEM).
        out2d = build(False)(h2d, wdq_p, bdq_p, wuq_p, buq_p)

    if d_out_p != d_out:
        # Only at non-lane-aligned (toy) widths; real MLA d_out is 128-aligned.
        out2d = out2d[:, :d_out]
    return out2d.reshape(B, S, d_out)


def _ref(h, wdq_t, bdq, wuq_t, buq):
    c = jnp.einsum("bsd,dl->bsl", h, wdq_t) + bdq
    return jnp.einsum("bsl,lo->bso", c, wuq_t) + buq


def _make_case(key, B, S, d_model, d_lat, d_out):
    k_h, k_wdq, k_bdq, k_wuq, k_buq = jax.random.split(key, 5)
    h = jax.random.normal(k_h, (B, S, d_model), dtype=jnp.float32)
    # "nn.Linear"-shaped params ([out, in]); kernel takes them transposed.
    W_DQ_weight = jax.random.normal(k_wdq, (d_lat, d_model), jnp.float32) * 0.05
    W_DQ_bias = jax.random.normal(k_bdq, (d_lat,), jnp.float32) * 0.01
    W_UQ_weight = jax.random.normal(k_wuq, (d_out, d_lat), jnp.float32) * 0.05
    W_UQ_bias = jax.random.normal(k_buq, (d_out,), jnp.float32) * 0.01
    return h, W_DQ_weight.T, W_DQ_bias, W_UQ_weight.T, W_UQ_bias


if __name__ == "__main__":
    key = jax.random.PRNGKey(0)
    k1, k2 = jax.random.split(key)

    # Case 1: toy widths, two token tiles (tm=8 -> grid_t=2), single d_out tile.
    B, S, d_model, d_lat, d_out = 2, 8, 32, 16, 32
    h, wdq_t, bdq, wuq_t, buq = _make_case(k1, B, S, d_model, d_lat, d_out)
    out = jax.block_until_ready(latent_q_attention(h, wdq_t, bdq, wuq_t, buq,
                                                   tm=8))
    ref = _ref(h, wdq_t, bdq, wuq_t, buq)
    assert out.shape == (B, S, d_out)
    assert jnp.allclose(out, ref, atol=1e-5, rtol=1e-5)

    # Case 2: exercises the d_out grid axis (tn=128 -> grid_n=2) with the
    # cached c_Q scratch, plus a ragged last token tile (T=14, tm=8).
    B, S, d_model, d_lat, d_out = 2, 7, 32, 16, 256
    h, wdq_t, bdq, wuq_t, buq = _make_case(k2, B, S, d_model, d_lat, d_out)
    out = jax.block_until_ready(latent_q_attention(h, wdq_t, bdq, wuq_t, buq,
                                                   tm=8, tn=128))
    ref = _ref(h, wdq_t, bdq, wuq_t, buq)
    assert out.shape == (B, S, d_out)
    assert jnp.allclose(out, ref, atol=1e-5, rtol=1e-5)

    print("KERNEL_OK")
</pallas_src>

<mosaic_0001>
module attributes {stable_mosaic.version = 11 : i64} {
  func.func @_latent_q_kernel(%arg0: i32, %arg1: i32, %arg2: memref<8x32xf32, #tpu.memory_space<vmem>>, %arg3: memref<32x128xf32, #tpu.memory_space<vmem>>, %arg4: memref<1x128xf32, #tpu.memory_space<vmem>>, %arg5: memref<128x128xf32, #tpu.memory_space<vmem>>, %arg6: memref<1x128xf32, #tpu.memory_space<vmem>>, %arg7: memref<8x128xf32, #tpu.memory_space<vmem>>, %arg8: memref<8x128xf32, #tpu.memory_space<vmem>>) attributes {dimension_semantics = [#tpu.dimension_semantics<parallel>, #tpu.dimension_semantics<arbitrary>], iteration_bounds = array<i64: 2, 1>, scalar_prefetch = 0 : i64, scratch_operands = 1 : i64, tpu.core_type = #tpu.core_type<tc>, window_params = [{transform_indices = @transform_0, window_bounds = array<i64: 8, 32>}, {pipeline_mode = #tpu.pipeline_mode<synchronous>, transform_indices = @transform_1, window_bounds = array<i64: 32, 128>}, {pipeline_mode = #tpu.pipeline_mode<synchronous>, transform_indices = @transform_2, window_bounds = array<i64: 1, 128>}, {pipeline_mode = #tpu.pipeline_mode<synchronous>, transform_indices = @transform_3, window_bounds = array<i64: 128, 128>}, {pipeline_mode = #tpu.pipeline_mode<synchronous>, transform_indices = @transform_4, window_bounds = array<i64: 1, 128>}, {transform_indices = @transform_5, window_bounds = array<i64: 8, 128>}]} {
    %c0_i32 = arith.constant 0 : i32
    %0 = arith.cmpi eq, %arg1, %c0_i32 : i32
    %1 = arith.extui %0 : i1 to i32
    %c0_i32_0 = arith.constant 0 : i32
    %2 = arith.cmpi ne, %1, %c0_i32_0 : i32
    scf.if %2 {
      %c0_8 = arith.constant 0 : index
      %c0_9 = arith.constant 0 : index
      %10 = vector.load %arg2[%c0_8, %c0_9] : memref<8x32xf32, #tpu.memory_space<vmem>>, vector<8x32xf32>
      %c0_10 = arith.constant 0 : index
      %c0_11 = arith.constant 0 : index
      %11 = vector.load %arg3[%c0_10, %c0_11] : memref<32x128xf32, #tpu.memory_space<vmem>>, vector<32x128xf32>
      %cst_12 = arith.constant dense<0.000000e+00> : vector<8x128xf32>
      %12 = tpu.matmul %10, %11, %cst_12 {dimension_numbers = #tpu.dot_dimension_numbers<[1], [0], [0], [1], [0, 0, 1, 1], [], []>} : vector<8x32xf32>, vector<32x128xf32>, vector<8x128xf32> -> vector<8x128xf32>
      %c0_13 = arith.constant 0 : index
      %c0_14 = arith.constant 0 : index
      %13 = vector.load %arg4[%c0_13, %c0_14] : memref<1x128xf32, #tpu.memory_space<vmem>>, vector<1x128xf32>
      %14 = vector.broadcast %13 : vector<1x128xf32> to vector<8x128xf32>
      %15 = arith.addf %12, %14 : vector<8x128xf32>
      %c0_15 = arith.constant 0 : index
      %c0_16 = arith.constant 0 : index
      %16 = vector.load %arg8[%c0_15, %c0_16] : memref<8x128xf32, #tpu.memory_space<vmem>>, vector<8x128xf32>
      tpu.vector_store %arg8[%c0_15, %c0_16], %15 {strides = array<i32>} : memref<8x128xf32, #tpu.memory_space<vmem>>, vector<8x128xf32>,
    } else {
    }
    %c0 = arith.constant 0 : index
    %c0_1 = arith.constant 0 : index
    %3 = vector.load %arg8[%c0, %c0_1] : memref<8x128xf32, #tpu.memory_space<vmem>>, vector<8x128xf32>
    %c0_2 = arith.constant 0 : index
    %c0_3 = arith.constant 0 : index
    %4 = vector.load %arg5[%c0_2, %c0_3] : memref<128x128xf32, #tpu.memory_space<vmem>>, vector<128x128xf32>
    %cst = arith.constant dense<0.000000e+00> : vector<8x128xf32>
    %5 = tpu.matmul %3, %4, %cst {dimension_numbers = #tpu.dot_dimension_numbers<[1], [0], [0], [1], [0, 0, 1, 1], [], []>} : vector<8x128xf32>, vector<128x128xf32>, vector<8x128xf32> -> vector<8x128xf32>
    %c0_4 = arith.constant 0 : index
    %c0_5 = arith.constant 0 : index
    %6 = vector.load %arg6[%c0_4, %c0_5] : memref<1x128xf32, #tpu.memory_space<vmem>>, vector<1x128xf32>
    %7 = vector.broadcast %6 : vector<1x128xf32> to vector<8x128xf32>
    %8 = arith.addf %5, %7 : vector<8x128xf32>
    %c0_6 = arith.constant 0 : index
    %c0_7 = arith.constant 0 : index
    %9 = vector.load %arg7[%c0_6, %c0_7] : memref<8x128xf32, #tpu.memory_space<vmem>>, vector<8x128xf32>
    tpu.vector_store %arg7[%c0_6, %c0_7], %8 {strides = array<i32>} : memref<8x128xf32, #tpu.memory_space<vmem>>, vector<8x128xf32>,
    return
  }
  func.func @transform_0(%arg0: i32, %arg1: i32) -> (i32, i32) {
    %c0_i32 = arith.constant 0 : i32
    %c0_i32_0 = arith.constant 0 : i32
    return %arg0, %c0_i32 : i32, i32
  }
  func.func @transform_1(%arg0: i32, %arg1: i32) -> (i32, i32) {
    %c0_i32 = arith.constant 0 : i32
    %c0_i32_0 = arith.constant 0 : i32
    %c0_i32_1 = arith.constant 0 : i32
    return %c0_i32, %c0_i32_0 : i32, i32
  }
  func.func @transform_2(%arg0: i32, %arg1: i32) -> (i32, i32) {
    %c0_i32 = arith.constant 0 : i32
    %c0_i32_0 = arith.constant 0 : i32
    %c0_i32_1 = arith.constant 0 : i32
    return %c0_i32, %c0_i32_0 : i32, i32
  }
  func.func @transform_3(%arg0: i32, %arg1: i32) -> (i32, i32) {
    %c0_i32 = arith.constant 0 : i32
    %c0_i32_0 = arith.constant 0 : i32
    return %c0_i32, %arg1 : i32, i32
  }
  func.func @transform_4(%arg0: i32, %arg1: i32) -> (i32, i32) {
    %c0_i32 = arith.constant 0 : i32
    %c0_i32_0 = arith.constant 0 : i32
    return %c0_i32, %arg1 : i32, i32
  }
  func.func @transform_5(%arg0: i32, %arg1: i32) -> (i32, i32) {
    %c0_i32 = arith.constant 0 : i32
    return %arg0, %arg1 : i32, i32
  }
}

module attributes {stable_mosaic.version = 11 : i64} {
  func.func @_latent_q_kernel(%arg0: i32, %arg1: i32, %arg2: memref<8x32xf32, #tpu.memory_space<vmem>>, %arg3: memref<32x128xf32, #tpu.memory_space<vmem>>, %arg4: memref<1x128xf32, #tpu.memory_space<vmem>>, %arg5: memref<128x128xf32, #tpu.memory_space<vmem>>, %arg6: memref<1x128xf32, #tpu.memory_space<vmem>>, %arg7: memref<8x128xf32, #tpu.memory_space<vmem>>, %arg8: memref<8x128xf32, #tpu.memory_space<vmem>>) attributes {dimension_semantics = [#tpu.dimension_semantics<parallel>, #tpu.dimension_semantics<arbitrary>], iteration_bounds = array<i64: 2, 1>, scalar_prefetch = 0 : i64, scratch_operands = 1 : i64, tpu.core_type = #tpu.core_type<tc>, window_params = [{transform_indices = @transform_0, window_bounds = array<i64: 8, 32>}, {pipeline_mode = #tpu.pipeline_mode<synchronous>, transform_indices = @transform_1, window_bounds = array<i64: 32, 128>}, {pipeline_mode = #tpu.pipeline_mode<synchronous>, transform_indices = @transform_2, window_bounds = array<i64: 1, 128>}, {transform_indices = @transform_3, window_bounds = array<i64: 128, 128>}, {transform_indices = @transform_4, window_bounds = array<i64: 1, 128>}, {transform_indices = @transform_5, window_bounds = array<i64: 8, 128>}]} {
    %c0_i32 = arith.constant 0 : i32
    %0 = arith.cmpi eq, %arg1, %c0_i32 : i32
    %1 = arith.extui %0 : i1 to i32
    %c0_i32_0 = arith.constant 0 : i32
    %2 = arith.cmpi ne, %1, %c0_i32_0 : i32
    scf.if %2 {
      %c0_8 = arith.constant 0 : index
      %c0_9 = arith.constant 0 : index
      %10 = vector.load %arg2[%c0_8, %c0_9] : memref<8x32xf32, #tpu.memory_space<vmem>>, vector<8x32xf32>
      %c0_10 = arith.constant 0 : index
      %c0_11 = arith.constant 0 : index
      %11 = vector.load %arg3[%c0_10, %c0_11] : memref<32x128xf32, #tpu.memory_space<vmem>>, vector<32x128xf32>
      %cst_12 = arith.constant dense<0.000000e+00> : vector<8x128xf32>
      %12 = tpu.matmul %10, %11, %cst_12 {dimension_numbers = #tpu.dot_dimension_numbers<[1], [0], [0], [1], [0, 0, 1, 1], [], []>} : vector<8x32xf32>, vector<32x128xf32>, vector<8x128xf32> -> vector<8x128xf32>
      %c0_13 = arith.constant 0 : index
      %c0_14 = arith.constant 0 : index
      %13 = vector.load %arg4[%c0_13, %c0_14] : memref<1x128xf32, #tpu.memory_space<vmem>>, vector<1x128xf32>
      %14 = vector.broadcast %13 : vector<1x128xf32> to vector<8x128xf32>
      %15 = arith.addf %12, %14 : vector<8x128xf32>
      %c0_15 = arith.constant 0 : index
      %c0_16 = arith.constant 0 : index
      %16 = vector.load %arg8[%c0_15, %c0_16] : memref<8x128xf32, #tpu.memory_space<vmem>>, vector<8x128xf32>
      tpu.vector_store %arg8[%c0_15, %c0_16], %15 {strides = array<i32>} : memref<8x128xf32, #tpu.memory_space<vmem>>, vector<8x128xf32>,
    } else {
    }
    %c0 = arith.constant 0 : index
    %c0_1 = arith.constant 0 : index
    %3 = vector.load %arg8[%c0, %c0_1] : memref<8x128xf32, #tpu.memory_space<vmem>>, vector<8x128xf32>
    %c0_2 = arith.constant 0 : index
    %c0_3 = arith.constant 0 : index
    %4 = vector.load %arg5[%c0_2, %c0_3] : memref<128x128xf32, #tpu.memory_space<vmem>>, vector<128x128xf32>
    %cst = arith.constant dense<0.000000e+00> : vector<8x128xf32>
    %5 = tpu.matmul %3, %4, %cst {dimension_numbers = #tpu.dot_dimension_numbers<[1], [0], [0], [1], [0, 0, 1, 1], [], []>} : vector<8x128xf32>, vector<128x128xf32>, vector<8x128xf32> -> vector<8x128xf32>
    %c0_4 = arith.constant 0 : index
    %c0_5 = arith.constant 0 : index
    %6 = vector.load %arg6[%c0_4, %c0_5] : memref<1x128xf32, #tpu.memory_space<vmem>>, vector<1x128xf32>
    %7 = vector.broadcast %6 : vector<1x128xf32> to vector<8x128xf32>
    %8 = arith.addf %5, %7 : vector<8x128xf32>
    %c0_6 = arith.constant 0 : index
    %c0_7 = arith.constant 0 : index
    %9 = vector.load %arg7[%c0_6, %c0_7] : memref<8x128xf32, #tpu.memory_space<vmem>>, vector<8x128xf32>
    tpu.vector_store %arg7[%c0_6, %c0_7], %8 {strides = array<i32>} : memref<8x128xf32, #tpu.memory_space<vmem>>, vector<8x128xf32>,
    return
  }
  func.func @transform_0(%arg0: i32, %arg1: i32) -> (i32, i32) {
    %c0_i32 = arith.constant 0 : i32
    %c0_i32_0 = arith.constant 0 : i32
    return %arg0, %c0_i32 : i32, i32
  }
  func.func @transform_1(%arg0: i32, %arg1: i32) -> (i32, i32) {
    %c0_i32 = arith.constant 0 : i32
    %c0_i32_0 = arith.constant 0 : i32
    %c0_i32_1 = arith.constant 0 : i32
    return %c0_i32, %c0_i32_0 : i32, i32
  }
  func.func @transform_2(%arg0: i32, %arg1: i32) -> (i32, i32) {
    %c0_i32 = arith.constant 0 : i32
    %c0_i32_0 = arith.constant 0 : i32
    %c0_i32_1 = arith.constant 0 : i32
    return %c0_i32, %c0_i32_0 : i32, i32
  }
  func.func @transform_3(%arg0: i32, %arg1: i32) -> (i32, i32) {
    %c0_i32 = arith.constant 0 : i32
    %c0_i32_0 = arith.constant 0 : i32
    return %c0_i32, %arg1 : i32, i32
  }
  func.func @transform_4(%arg0: i32, %arg1: i32) -> (i32, i32) {
    %c0_i32 = arith.constant 0 : i32
    %c0_i32_0 = arith.constant 0 : i32
    return %c0_i32, %arg1 : i32, i32
  }
  func.func @transform_5(%arg0: i32, %arg1: i32) -> (i32, i32) {
    %c0_i32 = arith.constant 0 : i32
    return %arg0, %arg1 : i32, i32
  }
}

</mosaic_0001>

<llo_original>
// kernel: tpu_custom_call.1
$region0: #{tpu_custom_call.1}
  #allocation0 [shape = 'u32[]', space=smem, size = 0x4, offset = 0x4, fixed_abs, tag = 'smem constant byte address 0x4 - core index']
  #allocation1 [shape = 'u32[144,128]{1,0:T(1,128)}', space=vmem, size = 0x12000, scoped, tag = 'internal scratch']
  #allocation2 [shape = 'f32[8,128]{1,0:T(8,128)}', space=vmem, size = 0x1000, scoped, tag = 'scratch operand']
  %s0 = inlined_call_operand.hbm [shape: f32[16,32], index: 0, kind: input, shape index: {}]
  %s1 = inlined_call_operand.hbm [shape: f32[32,128], index: 1, kind: input, shape index: {}]
  %s2 = inlined_call_operand.hbm [shape: f32[1,128], index: 2, kind: input, shape index: {}]
  %s3 = inlined_call_operand.hbm [shape: f32[128,128], index: 3, kind: input, shape index: {}]
  %s4 = inlined_call_operand.hbm [shape: f32[1,128], index: 4, kind: input, shape index: {}]
  %s5 = inlined_call_operand.hbm [shape: f32[16,128], index: 5, kind: output, shape index: {}]
  %s6 = sld [smem:[#allocation0]]
  $region77: #{tpu_custom_call.1} parent=0
    _
  %s8 = ssub.s32 1, %s6
  %s9 = scalar_select 0, %s8, %s6
  $region1: #{tpu_custom_call.1} parent=0
    #allocation3 [shape = 'u8[8192]{0}', space=vmem, size = 0x2000, scoped, tag = 'input window, operand 0']
    #allocation4 [shape = 's32[2]{0}', space=sflag, size = 0x8, scoped, tag = 'scoped memory for tpu_custom_call.1']
    #allocation5 [shape = 's32[2]{0}', space=sflag, size = 0x8, scoped, tag = 'scoped memory for tpu_custom_call.1']
    #allocation6 [shape = 'u8[16384]{0}', space=vmem, size = 0x4000, scoped, tag = 'input window, operand 1, single buffered']
    #allocation7 [shape = 's32[1]{0}', space=sflag, size = 0x4, scoped, tag = 'scoped memory for tpu_custom_call.1']
    #allocation8 [shape = 'u8[512]{0}', space=vmem, size = 0x400, scoped, tag = 'input window, operand 2, single buffered']
    #allocation9 [shape = 'u8[65536]{0}', space=vmem, size = 0x10000, scoped, tag = 'input window, operand 3, single buffered']
    #allocation10 [shape = 's32[1]{0}', space=sflag, size = 0x4, scoped, tag = 'scoped memory for tpu_custom_call.1']
    #allocation11 [shape = 'u8[512]{0}', space=vmem, size = 0x400, scoped, tag = 'input window, operand 4, single buffered']
    #allocation12 [shape = 'u8[8192]{0}', space=vmem, size = 0x2000, scoped, tag = 'output window, operand 0']
    %10 = vsyncpa [#allocation4], 0
    %s11 = scalar_lea.sflag [#allocation4], 1
    %12 = vsyncpa %s11, 0
    %13 = vsyncpa [#allocation7], 0
    %14 = vsyncpa [#allocation10], 0
    %15 = vsyncpa [#allocation5], 0
    %s16 = scalar_lea.sflag [#allocation5], 1
    %17 = vsyncpa %s16, 0
    loop: start=0, step=1, limit=4
    $region2: #{tpu_custom_call.1} parent=1 // loop_pre_header
      _
    $region3: #{tpu_custom_call.1} parent=1 // loop_header
      %s19 = sphi 0, %s23
      %p20 = scmp.ge.s32.totalorder %s19, 4
      %s26 = sphi 0, %s38
      %s27 = sphi 0, %s34
      %s28 = sphi 0, %s26
      %s29 = sphi 0, %s27
      %s30 = sphi 0, %s28
      %s31 = sphi 0, %s29
      %s41 = sphi 0, %s43
      %s44 = sphi 0, %s41
      %s45 = sphi 0, %s44
      %s61 = sphi 0, %s45
      %s65 = sphi 0, %s65
      %s67 = sphi 0, %s65
      %s68 = sphi 0, %s67
      %s82 = sphi 0, %s68
      %s86 = sphi 0, %s86
      %s88 = sphi 0, %s86
      %s89 = sphi 0, %s88
      %s103 = sphi 0, %s89
      %s109 = sphi 0, %s111
      %s112 = sphi 0, %s109
      %s113 = sphi 0, %s112
      %s129 = sphi 0, %s113
      %s135 = sphi 0, %s137
      %s138 = sphi 0, %s135
      %s139 = sphi 0, %s138
      %s155 = sphi 0, %s139
      %s163 = sphi 0, %s165
      %s166 = sphi 0, %s163
      %s167 = sphi 0, %s166
      %s183 = sphi 0, %s167
    $region4: #{tpu_custom_call.1} parent=1 // loop_header_branch
      %22 = sbr.rel (%p20) target = $region8
    $region5: #{tpu_custom_call.1} parent=1 // loop_body
      %s24 = ssub.s32 %s19, 1
      %s25 = ssub.s32 %s19, 2
      %s32 = sadd.s32 1, %s27
      %p33 = scmp.ge.s32.totalorder %s32, 1
      %s34 = scalar_select %p33, 0, %s32
      %s35 = sadd.s32 1, %s26
      %s36 = scalar_select %p33, %s35, %s26
      %p37 = scmp.ge.s32.totalorder %s36, 2
      %s38 = scalar_select %p37, 0, %s36
      %s39 = ssub.s32 %s26, %s38
      %p40 = scmp.eq.s32.totalorder %s39, 0
      %s42 = sadd.s32 %s41, 1
      %s43 = scalar_select %p40, %s41, %s42
      %p46 = pneg %p40
      %p47 = scmp.eq.s32.totalorder %s19, 1
      %p48 = por %p46, %p47
      %p49 = scmp.ne.s32.totalorder %s41, %s44
      %p50 = scmp.eq.s32.totalorder %s19, 0
      %p51 = por %p49, %p50
      %p52 = scmp.ne.s32.totalorder %s41, %s44
      %p53 = scmp.eq.s32.totalorder %s24, 1
      %p54 = por %p52, %p53
      %p55 = scmp.ne.s32.totalorder %s44, %s45
      %p56 = scmp.eq.s32.totalorder %s24, 0
      %p57 = por %p55, %p56
      %p58 = scmp.ne.s32.totalorder %s44, %s45
      %p59 = scmp.eq.s32.totalorder %s25, 1
      %p60 = por %p58, %p59
      %p62 = scmp.ne.s32.totalorder %s45, %s61
      %p63 = scmp.eq.s32.totalorder %s25, 0
      %p64 = por %p62, %p63
      %s66 = sadd.s32 %s65, 1
      %p69 = scmp.eq.s32.totalorder %s19, 1
      %p70 = scmp.ne.s32.totalorder %s65, %s67
      %p71 = scmp.eq.s32.totalorder %s19, 0
      %p72 = por %p70, %p71
      %p73 = scmp.ne.s32.totalorder %s65, %s67
      %p74 = scmp.eq.s32.totalorder %s24, 1
      %p75 = por %p73, %p74
      %p76 = scmp.ne.s32.totalorder %s67, %s68
      %p77 = scmp.eq.s32.totalorder %s24, 0
      %p78 = por %p76, %p77
      %p79 = scmp.ne.s32.totalorder %s67, %s68
      %p80 = scmp.eq.s32.totalorder %s25, 1
      %p81 = por %p79, %p80
      %p83 = scmp.ne.s32.totalorder %s68, %s82
      %p84 = scmp.eq.s32.totalorder %s25, 0
      %p85 = por %p83, %p84
      %s87 = sadd.s32 %s86, 1
      %p90 = scmp.eq.s32.totalorder %s19, 1
      %p91 = scmp.ne.s32.totalorder %s86, %s88
      %p92 = scmp.eq.s32.totalorder %s19, 0
      %p93 = por %p91, %p92
      %p94 = scmp.ne.s32.totalorder %s86, %s88
      %p95 = scmp.eq.s32.totalorder %s24, 1
      %p96 = por %p94, %p95
      %p97 = scmp.ne.s32.totalorder %s88, %s89
      %p98 = scmp.eq.s32.totalorder %s24, 0
      %p99 = por %p97, %p98
      %p100 = scmp.ne.s32.totalorder %s88, %s89
      %p101 = scmp.eq.s32.totalorder %s25, 1
      %p102 = por %p100, %p101
      %p104 = scmp.ne.s32.totalorder %s89, %s103
      %p105 = scmp.eq.s32.totalorder %s25, 0
      %p106 = por %p104, %p105
      %s107 = ssub.s32 %s27, %s34
      %p108 = scmp.eq.s32.totalorder %s107, 0
      %s110 = sadd.s32 %s109, 1
      %s111 = scalar_select %p108, %s109, %s110
      %p114 = pneg %p108
      %p115 = scmp.eq.s32.totalorder %s19, 1
      %p116 = por %p114, %p115
      %p117 = scmp.ne.s32.totalorder %s109, %s112
      %p118 = scmp.eq.s32.totalorder %s19, 0
      %p119 = por %p117, %p118
      %p120 = scmp.ne.s32.totalorder %s109, %s112
      %p121 = scmp.eq.s32.totalorder %s24, 1
      %p122 = por %p120, %p121
      %p123 = scmp.ne.s32.totalorder %s112, %s113
      %p124 = scmp.eq.s32.totalorder %s24, 0
      %p125 = por %p123, %p124
      %p126 = scmp.ne.s32.totalorder %s112, %s113
      %p127 = scmp.eq.s32.totalorder %s25, 1
      %p128 = por %p126, %p127
      %p130 = scmp.ne.s32.totalorder %s113, %s129
      %p131 = scmp.eq.s32.totalorder %s25, 0
      %p132 = por %p130, %p131
      %s133 = ssub.s32 %s27, %s34
      %p134 = scmp.eq.s32.totalorder %s133, 0
      %s136 = sadd.s32 %s135, 1
      %s137 = scalar_select %p134, %s135, %s136
      %p140 = pneg %p134
      %p141 = scmp.eq.s32.totalorder %s19, 1
      %p142 = por %p140, %p141
      %p143 = scmp.ne.s32.totalorder %s135, %s138
      %p144 = scmp.eq.s32.totalorder %s19, 0
      %p145 = por %p143, %p144
      %p146 = scmp.ne.s32.totalorder %s135, %s138
      %p147 = scmp.eq.s32.totalorder %s24, 1
      %p148 = por %p146, %p147
      %p149 = scmp.ne.s32.totalorder %s138, %s139
      %p150 = scmp.eq.s32.totalorder %s24, 0
      %p151 = por %p149, %p150
      %p152 = scmp.ne.s32.totalorder %s138, %s139
      %p153 = scmp.eq.s32.totalorder %s25, 1
      %p154 = por %p152, %p153
      %p156 = scmp.ne.s32.totalorder %s139, %s155
      %p157 = scmp.eq.s32.totalorder %s25, 0
      %p158 = por %p156, %p157
      %s159 = ssub.s32 %s26, %s38
      %s160 = ssub.s32 %s27, %s34
      %s161 = sor.u32 %s159, %s160
      %p162 = scmp.eq.s32.totalorder %s161, 0
      %s164 = sadd.s32 %s163, 1
      %s165 = scalar_select %p162, %s163, %s164
      %p168 = pneg %p162
      %p169 = scmp.eq.s32.totalorder %s19, 1
      %p170 = por %p168, %p169
      %p171 = scmp.ne.s32.totalorder %s163, %s166
      %p172 = scmp.eq.s32.totalorder %s19, 0
      %p173 = por %p171, %p172
      %p174 = scmp.ne.s32.totalorder %s163, %s166
      %p175 = scmp.eq.s32.totalorder %s24, 1
      %p176 = por %p174, %p175
      %p177 = scmp.ne.s32.totalorder %s166, %s167
      %p178 = scmp.eq.s32.totalorder %s24, 0
      %p179 = por %p177, %p178
      %p180 = scmp.ne.s32.totalorder %s166, %s167
      %p181 = scmp.eq.s32.totalorder %s25, 1
      %p182 = por %p180, %p181
      %p184 = scmp.ne.s32.totalorder %s167, %s183
      %p185 = scmp.eq.s32.totalorder %s25, 0
      %p186 = por %p184, %p185
      %p187 = scmp.le.s32.totalorder 1, %s19
      %p188 = scmp.lt.s32.totalorder %s19, 3
      %p189 = pnand %p187, %p188
      %p190 = pneg %p189
      // Predicated region
      $region9: #{tpu_custom_call.1} parent=5 // pred_check
        _
      $region10: #{tpu_custom_call.1} parent=5 // pred_check_branch
        %192 = sbr.rel (%p189) target = $region12
      $region11: #{tpu_custom_call.1} parent=5 // pred_region
        %s193 = ssub.s32 %s19, 1
        // Predicated region
        $region13: #{tpu_custom_call.1} parent=11 // pred_check
          %p194 = pneg %p78
        $region14: #{tpu_custom_call.1} parent=11 // pred_check_branch
          %196 = sbr.rel (%p194) target = $region16
        $region15: #{tpu_custom_call.1} parent=11 // pred_region
          %s198 = ssub.s32 512, 512
          %199 = vsyncadd [#allocation7], %s198
          %s200 = sshll.u32 [#allocation6], 4
          %s201 = int_to_ptr.vmem [resolvable:$true] %s200
          %206 = dma.hbm_to_vmem [thread:$0]  %s1, 512, %s201, [#allocation7], 128, 128, 8
        $region16: #{tpu_custom_call.1} parent=11 // pred_fallthru
          _
        // Predicated region
        $region17: #{tpu_custom_call.1} parent=11 // pred_check
          %p207 = pneg %p99
        $region18: #{tpu_custom_call.1} parent=11 // pred_check_branch
          %209 = sbr.rel (%p207) target = $region20
        $region19: #{tpu_custom_call.1} parent=11 // pred_region
          %s211 = ssub.s32 16, 16
          %212 = vsyncadd [#allocation7], %s211
          %s214 = sshll.u32 [#allocation8], 4
          %s215 = int_to_ptr.vmem [resolvable:$true] %s214
          %217 = dma.hbm_to_vmem [thread:$0]  %s2, 16, %s215, [#allocation7]
        $region20: #{tpu_custom_call.1} parent=11 // pred_fallthru
          _
        // Predicated region
        $region21: #{tpu_custom_call.1} parent=11 // pred_check
          %p218 = pneg %p125
        $region22: #{tpu_custom_call.1} parent=11 // pred_check_branch
          %220 = sbr.rel (%p218) target = $region24
        $region23: #{tpu_custom_call.1} parent=11 // pred_region
          %s222 = ssub.s32 2048, 2048
          %223 = vsyncadd [#allocation10], %s222
          %s224 = smul.addr %s29, 128
          %s225 = scalar_lea.hbm %s3, %s224
          %s226 = sshll.u32 [#allocation9], 4
          %s227 = int_to_ptr.vmem [resolvable:$true] %s226
          %232 = dma.hbm_to_vmem [thread:$0]  %s225, 2048, %s227, [#allocation10], 128, 128, 8
        $region24: #{tpu_custom_call.1} parent=11 // pred_fallthru
          _
        // Predicated region
        $region25: #{tpu_custom_call.1} parent=11 // pred_check
          %p233 = pneg %p151
        $region26: #{tpu_custom_call.1} parent=11 // pred_check_branch
          %235 = sbr.rel (%p233) target = $region28
        $region27: #{tpu_custom_call.1} parent=11 // pred_region
          %s237 = ssub.s32 16, 16
          %238 = vsyncadd [#allocation10], %s237
          %s239 = smul.addr %s29, 16
          %s240 = scalar_lea.hbm %s4, %s239
          %s242 = sshll.u32 [#allocation11], 4
          %s243 = int_to_ptr.vmem [resolvable:$true] %s242
          %245 = dma.hbm_to_vmem [thread:$0]  %s240, 16, %s243, [#allocation10]
        $region28: #{tpu_custom_call.1} parent=11 // pred_fallthru
          _
      $region12: #{tpu_custom_call.1} parent=5 // pred_fallthru
        _
      %p246 = scmp.lt.s32.totalorder %s19, 2
      // Predicated region
      $region29: #{tpu_custom_call.1} parent=5 // pred_check
        %p247 = pneg %p246
      $region30: #{tpu_custom_call.1} parent=5 // pred_check_branch
        %249 = sbr.rel (%p247) target = $region32
      $region31: #{tpu_custom_call.1} parent=5 // pred_region
        // Predicated region
        $region33: #{tpu_custom_call.1} parent=31 // pred_check
          %p250 = pneg %p51
        $region34: #{tpu_custom_call.1} parent=31 // pred_check_branch
          %252 = sbr.rel (%p250) target = $region36
        $region35: #{tpu_custom_call.1} parent=31 // pred_region
          %s253 = sand.u32 %s41, 1
          %s254 = scalar_lea.sflag [#allocation4], %s253
          %s255 = sand.u32 %s41, 1
          %s256 = smul.addr %s255, 8
          %s257 = scalar_lea.vmem [#allocation3], %s256
          %s259 = ssub.s32 128, 128
          %260 = vsyncadd %s254, %s259
          %s261 = smul.addr %s26, 128
          %s262 = scalar_lea.hbm %s0, %s261
          %s264 = sshll.u32 %s257, 4
          %s265 = int_to_ptr.vmem [resolvable:$true] %s264
          %267 = dma.hbm_to_vmem [thread:$0]  %s262, 128, %s265, %s254
        $region36: #{tpu_custom_call.1} parent=31 // pred_fallthru
          _
      $region32: #{tpu_custom_call.1} parent=5 // pred_fallthru
        _
      %p268 = scmp.le.s32.totalorder 1, %s19
      %p269 = scmp.lt.s32.totalorder %s19, 3
      %p270 = pnand %p268, %p269
      %p271 = pneg %p270
      // Predicated region
      $region37: #{tpu_custom_call.1} parent=5 // pred_check
        _
      $region38: #{tpu_custom_call.1} parent=5 // pred_check_branch
        %273 = sbr.rel (%p270) target = $region40
      $region39: #{tpu_custom_call.1} parent=5 // pred_region
        %s274 = ssub.s32 %s19, 1
        %s275 = sand.u32 %s44, 1
        %s276 = scalar_lea.sflag [#allocation4], %s275
        %s277 = sand.u32 %s44, 1
        %s278 = smul.addr %s277, 8
        %s279 = scalar_lea.vmem [#allocation3], %s278
        // Predicated region
        $region41: #{tpu_custom_call.1} parent=39 // pred_check
          %p280 = pneg %p57
        $region42: #{tpu_custom_call.1} parent=39 // pred_check_branch
          %282 = sbr.rel (%p280) target = $region44
        $region43: #{tpu_custom_call.1} parent=39 // pred_region
          %283 = dma.done %s276, 128
        $region44: #{tpu_custom_call.1} parent=39 // pred_fallthru
          _
        // Predicated region
        $region45: #{tpu_custom_call.1} parent=39 // pred_check
          %p284 = pneg %p78
        $region46: #{tpu_custom_call.1} parent=39 // pred_check_branch
          %286 = sbr.rel (%p284) target = $region48
        $region47: #{tpu_custom_call.1} parent=39 // pred_region
          %287 = dma.done [#allocation7], 512
        $region48: #{tpu_custom_call.1} parent=39 // pred_fallthru
          _
        // Predicated region
        $region49: #{tpu_custom_call.1} parent=39 // pred_check
          %p288 = pneg %p99
        $region50: #{tpu_custom_call.1} parent=39 // pred_check_branch
          %290 = sbr.rel (%p288) target = $region52
        $region51: #{tpu_custom_call.1} parent=39 // pred_region
          %291 = dma.done [#allocation7], 16
        $region52: #{tpu_custom_call.1} parent=39 // pred_fallthru
          _
        // Predicated region
        $region53: #{tpu_custom_call.1} parent=39 // pred_check
          %p292 = pneg %p125
        $region54: #{tpu_custom_call.1} parent=39 // pred_check_branch
          %294 = sbr.rel (%p292) target = $region56
        $region55: #{tpu_custom_call.1} parent=39 // pred_region
          %295 = dma.done [#allocation10], 2048
        $region56: #{tpu_custom_call.1} parent=39 // pred_fallthru
          _
        // Predicated region
        $region57: #{tpu_custom_call.1} parent=39 // pred_check
          %p296 = pneg %p151
        $region58: #{tpu_custom_call.1} parent=39 // pred_check_branch
          %298 = sbr.rel (%p296) target = $region60
        $region59: #{tpu_custom_call.1} parent=39 // pred_region
          %299 = dma.done [#allocation10], 16
        $region60: #{tpu_custom_call.1} parent=39 // pred_fallthru
          _
        %s300 = sand.u32 %s44, 1
        %s301 = scalar_lea.sflag [#allocation4], %s300
        %s302 = sand.u32 %s44, 1
        %s303 = smul.addr %s302, 8
        %s304 = scalar_lea.vmem [#allocation3], %s303
        %p305 = pneg %p57
        %p306 = pneg %p54
        %p307 = pneg %p78
        %p308 = pneg %p75
        %p309 = pneg %p99
        %p310 = pneg %p96
        %p311 = pneg %p125
        %p312 = pneg %p122
        %p313 = pneg %p151
        %p314 = pneg %p148
        %p315 = pneg %p179
        %p316 = pneg %p176
        %s317 = sand.u32 %s166, 1
        %s318 = scalar_lea.sflag [#allocation5], %s317
        %s319 = sand.u32 %s166, 1
        %s320 = smul.addr %s319, 8
        %s321 = scalar_lea.vmem [#allocation12], %s320
        %p322 = scmp.eq.s32.totalorder %s29, 0
        // Predicated region
        $region61: #{tpu_custom_call.1} parent=39 // pred_check
          %p323 = pneg %p322
        $region62: #{tpu_custom_call.1} parent=39 // pred_check_branch
          %325 = sbr.rel (%p323) target = $region64
        $region63: #{tpu_custom_call.1} parent=39 // pred_region
          %v326 = vld [vmem:[%s279] sm:$0xff]
          %v327 = vld [vmem:[#allocation6] sm:$0xff]
          %v328 = vld [vmem:[#allocation6 + $0x8] sm:$0xff]
          %v329 = vld [vmem:[#allocation6 + $0x10] sm:$0xff]
          %v330 = vld [vmem:[#allocation6 + $0x18] sm:$0xff]
          %v331 = vld [vmem:[#allocation8] sm:$0x1]
          %v333 = vlaneseq
          %v334 = vshrl.u32 %v333, 7
          %v335 = vsub.s32 0, %v334
          %v336 = vrot.slane %v331, %v335
          %vm338 = vcmask 261120
          %v340 = vsel %vm338, %v326, 0
          %342 = vmatprep.subr.mxu0 0.0
          %343 = vmatpush1.msra.mxu0 %v327
          %344 = vmatprep.subr.mxu0 0.0
          %345 = vmatpush1.msra.mxu0 %v328
          %346 = vmatprep.subr.mxu0 0.0
          %347 = vmatpush1.msra.mxu0 %v329
          %348 = vmatprep.subr.mxu0 0.0
          %349 = vmatpush1.msra.mxu0 %v330
          %350 = vmatprep.subr.mxu0 0.0
          %351 = vmatpush1.msra.mxu0 0.0
          %352 = vmatprep.subr.mxu0 0.0
          %353 = vmatpush1.msra.mxu0 0.0
          %354 = vmatprep.subr.mxu0 0.0
          %355 = vmatpush1.msra.mxu0 0.0
          %356 = vmatprep.subr.mxu0 0.0
          %357 = vmatpush1.msra.mxu0 0.0
          %358 = vmatprep.subr.mxu0 0.0
          %359 = vmatpush1.msra.mxu0 0.0
          %360 = vmatprep.subr.mxu0 0.0
          %361 = vmatpush1.msra.mxu0 0.0
          %362 = vmatprep.subr.mxu0 0.0
          %363 = vmatpush1.msra.mxu0 0.0
          %364 = vmatprep.subr.mxu0 0.0
          %365 = vmatpush1.msra.mxu0 0.0
          %366 = vmatprep.subr.mxu0 0.0
          %367 = vmatpush1.msra.mxu0 0.0
          %368 = vmatprep.subr.mxu0 0.0
          %369 = vmatpush1.msra.mxu0 0.0
          %370 = vmatprep.subr.mxu0 0.0
          %371 = vmatpush1.msra.mxu0 0.0
          %372 = vmatprep.subr.mxu0 0.0
          %373 = vmatpush1.msra.mxu0 0.0
          %374 = vmatprep.subr.mxu0 0.0
          %375 = vmatpush1.msra.mxu0 0.0
          %376 = vmatprep.subr.mxu0 0.0
          %377 = vmatpush1.msra.mxu0 0.0
          %378 = vmatprep.subr.mxu0 0.0
          %379 = vmatpush1.msra.mxu0 0.0
          %380 = vmatprep.subr.mxu0 0.0
          %381 = vmatpush1.msra.mxu0 0.0
          %382 = vmatprep.subr.mxu0 0.0
          %383 = vmatpush1.msra.mxu0 0.0
          %384 = vmatprep.subr.mxu0 0.0
          %385 = vmatpush1.msra.mxu0 0.0
          %386 = vmatprep.subr.mxu0 0.0
          %387 = vmatpush1.msra.mxu0 0.0
          %388 = vmatprep.subr.mxu0 0.0
          %389 = vmatpush1.msra.mxu0 0.0
          %390 = vmatprep.subr.mxu0 0.0
          %391 = vmatpush1.msra.mxu0 0.0
          %392 = vmatprep.subr.mxu0 0.0
          %393 = vmatpush1.msra.mxu0 0.0
          %394 = vmatprep.subr.mxu0 0.0
          %395 = vmatpush1.msra.mxu0 0.0
          %396 = vmatprep.subr.mxu0 0.0
          %397 = vmatpush1.msra.mxu0 0.0
          %398 = vmatprep.subr.mxu0 0.0
          %399 = vmatpush1.msra.mxu0 0.0
          %400 = vmatprep.subr.mxu0 0.0
          %401 = vmatpush1.msra.mxu0 0.0
          %402 = vmatprep.subr.mxu0 0.0
          %403 = vmatpush1.msra.mxu0 0.0
          %404 = vmatprep.subr.mxu0 0.0
          %405 = vmatpush1.msra.mxu0 0.0
          %406 = vmatprep.mubr.f32.mxu0 0.0
          %407 = vmatmul.mubr.f32.gmra.mrb[0].mxu0 %v340
          %v408 = vpop.f32.mrb[0].mxu0
          %v409 = vadd.f32 %v336, %v408
          %v410 = vpop.f32.mrb[0].mxu0
          %411 = vdwg.mxu0
          %412 = vst [vmem:[#allocation2] sm:$0xff] %v409
        $region64: #{tpu_custom_call.1} parent=39 // pred_fallthru
          _
        %v413 = vld [vmem:[#allocation2] sm:$0xff]
        %v414 = vld [vmem:[#allocation9] sm:$0xff]
        %v415 = vld [vmem:[#allocation9 + $0x8] sm:$0xff]
        %v416 = vld [vmem:[#allocation9 + $0x10] sm:$0xff]
        %v417 = vld [vmem:[#allocation9 + $0x18] sm:$0xff]
        %v418 = vld [vmem:[#allocation9 + $0x20] sm:$0xff]
        %v419 = vld [vmem:[#allocation9 + $0x28] sm:$0xff]
        %v420 = vld [vmem:[#allocation9 + $0x30] sm:$0xff]
        %v421 = vld [vmem:[#allocation9 + $0x38] sm:$0xff]
        %v422 = vld [vmem:[#allocation9 + $0x40] sm:$0xff]
        %v423 = vld [vmem:[#allocation9 + $0x48] sm:$0xff]
        %v424 = vld [vmem:[#allocation9 + $0x50] sm:$0xff]
        %v425 = vld [vmem:[#allocation9 + $0x58] sm:$0xff]
        %v426 = vld [vmem:[#allocation9 + $0x60] sm:$0xff]
        %v427 = vld [vmem:[#allocation9 + $0x68] sm:$0xff]
        %v428 = vld [vmem:[#allocation9 + $0x70] sm:$0xff]
        %v429 = vld [vmem:[#allocation9 + $0x78] sm:$0xff]
        %v430 = vld [vmem:[#allocation11] sm:$0x1]
        %v432 = vlaneseq
        %v433 = vshrl.u32 %v432, 7
        %v434 = vsub.s32 0, %v433
        %v435 = vrot.slane %v430, %v434
        %437 = vmatprep.subr.mxu0 0.0
        %438 = vmatpush1.msra.mxu0 %v414
        %439 = vmatprep.subr.mxu0 0.0
        %440 = vmatpush1.msra.mxu0 %v415
        %441 = vmatprep.subr.mxu0 0.0
        %442 = vmatpush1.msra.mxu0 %v416
        %443 = vmatprep.subr.mxu0 0.0
        %444 = vmatpush1.msra.mxu0 %v417
        %445 = vmatprep.subr.mxu0 0.0
        %446 = vmatpush1.msra.mxu0 %v418
        %447 = vmatprep.subr.mxu0 0.0
        %448 = vmatpush1.msra.mxu0 %v419
        %449 = vmatprep.subr.mxu0 0.0
        %450 = vmatpush1.msra.mxu0 %v420
        %451 = vmatprep.subr.mxu0 0.0
        %452 = vmatpush1.msra.mxu0 %v421
        %453 = vmatprep.subr.mxu0 0.0
        %454 = vmatpush1.msra.mxu0 %v422
        %455 = vmatprep.subr.mxu0 0.0
        %456 = vmatpush1.msra.mxu0 %v423
        %457 = vmatprep.subr.mxu0 0.0
        %458 = vmatpush1.msra.mxu0 %v424
        %459 = vmatprep.subr.mxu0 0.0
        %460 = vmatpush1.msra.mxu0 %v425
        %461 = vmatprep.subr.mxu0 0.0
        %462 = vmatpush1.msra.mxu0 %v426
        %463 = vmatprep.subr.mxu0 0.0
        %464 = vmatpush1.msra.mxu0 %v427
        %465 = vmatprep.subr.mxu0 0.0
        %466 = vmatpush1.msra.mxu0 %v428
        %467 = vmatprep.subr.mxu0 0.0
        %468 = vmatpush1.msra.mxu0 %v429
        %469 = vmatprep.subr.mxu0 0.0
        %470 = vmatpush1.msra.mxu0 0.0
        %471 = vmatprep.subr.mxu0 0.0
        %472 = vmatpush1.msra.mxu0 0.0
        %473 = vmatprep.subr.mxu0 0.0
        %474 = vmatpush1.msra.mxu0 0.0
        %475 = vmatprep.subr.mxu0 0.0
        %476 = vmatpush1.msra.mxu0 0.0
        %477 = vmatprep.subr.mxu0 0.0
        %478 = vmatpush1.msra.mxu0 0.0
        %479 = vmatprep.subr.mxu0 0.0
        %480 = vmatpush1.msra.mxu0 0.0
        %481 = vmatprep.subr.mxu0 0.0
        %482 = vmatpush1.msra.mxu0 0.0
        %483 = vmatprep.subr.mxu0 0.0
        %484 = vmatpush1.msra.mxu0 0.0
        %485 = vmatprep.subr.mxu0 0.0
        %486 = vmatpush1.msra.mxu0 0.0
        %487 = vmatprep.subr.mxu0 0.0
        %488 = vmatpush1.msra.mxu0 0.0
        %489 = vmatprep.subr.mxu0 0.0
        %490 = vmatpush1.msra.mxu0 0.0
        %491 = vmatprep.subr.mxu0 0.0
        %492 = vmatpush1.msra.mxu0 0.0
        %493 = vmatprep.subr.mxu0 0.0
        %494 = vmatpush1.msra.mxu0 0.0
        %495 = vmatprep.subr.mxu0 0.0
        %496 = vmatpush1.msra.mxu0 0.0
        %497 = vmatprep.subr.mxu0 0.0
        %498 = vmatpush1.msra.mxu0 0.0
        %499 = vmatprep.subr.mxu0 0.0
        %500 = vmatpush1.msra.mxu0 0.0
        %501 = vmatprep.mubr.f32.mxu0 0.0
        %502 = vmatmul.mubr.f32.gmra.mrb[0].mxu0 %v413
        %v503 = vpop.f32.mrb[0].mxu0
        %v504 = vadd.f32 %v435, %v503
        %v505 = vpop.f32.mrb[0].mxu0
        %506 = vdwg.mxu0
        %507 = vst [vmem:[%s321] sm:$0xff] %v504
        %s508 = sand.u32 %s166, 1
        %s509 = scalar_lea.sflag [#allocation5], %s508
        %s510 = sand.u32 %s166, 1
        %s511 = smul.addr %s510, 8
        %s512 = scalar_lea.vmem [#allocation12], %s511
        // Predicated region
        $region65: #{tpu_custom_call.1} parent=39 // pred_check
          %p513 = pneg %p176
        $region66: #{tpu_custom_call.1} parent=39 // pred_check_branch
          %515 = sbr.rel (%p513) target = $region68
        $region67: #{tpu_custom_call.1} parent=39 // pred_region
          %s517 = ssub.s32 128, 128
          %518 = vsyncadd %s509, %s517
          %s519 = sadd.s32 %s29, %s28
          %s520 = smul.addr %s519, 128
          %s521 = scalar_lea.hbm %s5, %s520
          %s523 = sshll.u32 %s512, 4
          %s524 = int_to_ptr.vmem [resolvable:$true] %s523
          %526 = dma.vmem_to_hbm [thread:$0]  %s524, 128, %s521, %s509
        $region68: #{tpu_custom_call.1} parent=39 // pred_fallthru
          _
      $region40: #{tpu_custom_call.1} parent=5 // pred_fallthru
        _
      %p527 = scmp.le.s32.totalorder 2, %s19
      // Predicated region
      $region69: #{tpu_custom_call.1} parent=5 // pred_check
        %p528 = pneg %p527
      $region70: #{tpu_custom_call.1} parent=5 // pred_check_branch
        %530 = sbr.rel (%p528) target = $region72
      $region71: #{tpu_custom_call.1} parent=5 // pred_region
        %s531 = ssub.s32 %s19, 2
        // Predicated region
        $region73: #{tpu_custom_call.1} parent=71 // pred_check
          %p532 = pneg %p182
        $region74: #{tpu_custom_call.1} parent=71 // pred_check_branch
          %534 = sbr.rel (%p532) target = $region76
        $region75: #{tpu_custom_call.1} parent=71 // pred_region
          %s535 = sand.u32 %s167, 1
          %s536 = scalar_lea.sflag [#allocation5], %s535
          %s537 = sand.u32 %s167, 1
          %s538 = smul.addr %s537, 8
          %s539 = scalar_lea.vmem [#allocation12], %s538
          %540 = dma.done %s536, 128
        $region76: #{tpu_custom_call.1} parent=71 // pred_fallthru
          _
      $region72: #{tpu_custom_call.1} parent=5 // pred_fallthru
        _
    $region6: #{tpu_custom_call.1} parent=1 // loop_footer
      %s23 = sadd.s32 1, %s19
    $region7: #{tpu_custom_call.1} parent=1 // loop_footer_branch
      %18 = sbr.rel target = $region3
    $region8: #{tpu_custom_call.1} parent=1 // loop_exit
      _
    %541 = vsyncpa [#allocation4], 1
    %s542 = scalar_lea.sflag [#allocation4], 1
    %543 = vsyncpa %s542, 1
    %544 = vsyncpa [#allocation7], 1
    %545 = vsyncpa [#allocation10], 1
    %546 = vsyncpa [#allocation5], 1
    %s547 = scalar_lea.sflag [#allocation5], 1
    %548 = vsyncpa %s547, 1

// kernel: tpu_custom_call.1
$region0: #{tpu_custom_call.1}
  #allocation0 [shape = 'u32[]', space=smem, size = 0x4, offset = 0x4, fixed_abs, tag = 'smem constant byte address 0x4 - core index']
  #allocation1 [shape = 'u32[144,128]{1,0:T(1,128)}', space=vmem, size = 0x12000, scoped, tag = 'internal scratch']
  #allocation2 [shape = 'f32[8,128]{1,0:T(8,128)}', space=vmem, size = 0x1000, scoped, tag = 'scratch operand']
  %s0 = inlined_call_operand.hbm [shape: f32[16,32], index: 0, kind: input, shape index: {}]
  %s1 = inlined_call_operand.hbm [shape: f32[32,128], index: 1, kind: input, shape index: {}]
  %s2 = inlined_call_operand.hbm [shape: f32[1,128], index: 2, kind: input, shape index: {}]
  %s3 = inlined_call_operand.hbm [shape: f32[128,128], index: 3, kind: input, shape index: {}]
  %s4 = inlined_call_operand.hbm [shape: f32[1,128], index: 4, kind: input, shape index: {}]
  %s5 = inlined_call_operand.hbm [shape: f32[16,128], index: 5, kind: output, shape index: {}]
  %s6 = sld [smem:[#allocation0]]
  $region77: #{tpu_custom_call.1} parent=0
    _
  %s8 = ssub.s32 1, %s6
  %s9 = scalar_select 0, %s8, %s6
  $region1: #{tpu_custom_call.1} parent=0
    #allocation3 [shape = 'u8[8192]{0}', space=vmem, size = 0x2000, scoped, tag = 'input window, operand 0']
    #allocation4 [shape = 's32[2]{0}', space=sflag, size = 0x8, scoped, tag = 'scoped memory for tpu_custom_call.1']
    #allocation5 [shape = 's32[2]{0}', space=sflag, size = 0x8, scoped, tag = 'scoped memory for tpu_custom_call.1']
    #allocation6 [shape = 'u8[16384]{0}', space=vmem, size = 0x4000, scoped, tag = 'input window, operand 1, single buffered']
    #allocation7 [shape = 's32[1]{0}', space=sflag, size = 0x4, scoped, tag = 'scoped memory for tpu_custom_call.1']
    #allocation8 [shape = 'u8[512]{0}', space=vmem, size = 0x400, scoped, tag = 'input window, operand 2, single buffered']
    #allocation9 [shape = 'u8[65536]{0}', space=vmem, size = 0x10000, scoped, tag = 'input window, operand 3, single buffered']
    #allocation10 [shape = 's32[1]{0}', space=sflag, size = 0x4, scoped, tag = 'scoped memory for tpu_custom_call.1']
    #allocation11 [shape = 'u8[512]{0}', space=vmem, size = 0x400, scoped, tag = 'input window, operand 4, single buffered']
    #allocation12 [shape = 'u8[8192]{0}', space=vmem, size = 0x2000, scoped, tag = 'output window, operand 0']
    %10 = vsyncpa [#allocation4], 0
    %s11 = scalar_lea.sflag [#allocation4], 1
    %12 = vsyncpa %s11, 0
    %13 = vsyncpa [#allocation7], 0
    %14 = vsyncpa [#allocation10], 0
    %15 = vsyncpa [#allocation5], 0
    %s16 = scalar_lea.sflag [#allocation5], 1
    %17 = vsyncpa %s16, 0
    loop: start=0, step=1, limit=4
    $region2: #{tpu_custom_call.1} parent=1 // loop_pre_header
      _
    $region3: #{tpu_custom_call.1} parent=1 // loop_header
      %s19 = sphi 0, %s23
      %p20 = scmp.ge.s32.totalorder %s19, 4
      %s26 = sphi 0, %s38
      %s27 = sphi 0, %s34
      %s28 = sphi 0, %s26
      %s29 = sphi 0, %s27
      %s30 = sphi 0, %s28
      %s31 = sphi 0, %s29
      %s41 = sphi 0, %s43
      %s44 = sphi 0, %s41
      %s45 = sphi 0, %s44
      %s61 = sphi 0, %s45
      %s65 = sphi 0, %s65
      %s67 = sphi 0, %s65
      %s68 = sphi 0, %s67
      %s82 = sphi 0, %s68
      %s86 = sphi 0, %s86
      %s88 = sphi 0, %s86
      %s89 = sphi 0, %s88
      %s103 = sphi 0, %s89
      %s109 = sphi 0, %s111
      %s112 = sphi 0, %s109
      %s113 = sphi 0, %s112
      %s129 = sphi 0, %s113
      %s135 = sphi 0, %s137
      %s138 = sphi 0, %s135
      %s139 = sphi 0, %s138
      %s155 = sphi 0, %s139
      %s163 = sphi 0, %s165
      %s166 = sphi 0, %s163
      %s167 = sphi 0, %s166
      %s183 = sphi 0, %s167
    $region4: #{tpu_custom_call.1} parent=1 // loop_header_branch
      %22 = sbr.rel (%p20) target = $region8
    $region5: #{tpu_custom_call.1} parent=1 // loop_body
      %s24 = ssub.s32 %s19, 1
      %s25 = ssub.s32 %s19, 2
      %s32 = sadd.s32 1, %s27
      %p33 = scmp.ge.s32.totalorder %s32, 1
      %s34 = scalar_select %p33, 0, %s32
      %s35 = sadd.s32 1, %s26
      %s36 = scalar_select %p33, %s35, %s26
      %p37 = scmp.ge.s32.totalorder %s36, 2
      %s38 = scalar_select %p37, 0, %s36
      %s39 = ssub.s32 %s26, %s38
      %p40 = scmp.eq.s32.totalorder %s39, 0
      %s42 = sadd.s32 %s41, 1
      %s43 = scalar_select %p40, %s41, %s42
      %p46 = pneg %p40
      %p47 = scmp.eq.s32.totalorder %s19, 1
      %p48 = por %p46, %p47
      %p49 = scmp.ne.s32.totalorder %s41, %s44
      %p50 = scmp.eq.s32.totalorder %s19, 0
      %p51 = por %p49, %p50
      %p52 = scmp.ne.s32.totalorder %s41, %s44
      %p53 = scmp.eq.s32.totalorder %s24, 1
      %p54 = por %p52, %p53
      %p55 = scmp.ne.s32.totalorder %s44, %s45
      %p56 = scmp.eq.s32.totalorder %s24, 0
      %p57 = por %p55, %p56
      %p58 = scmp.ne.s32.totalorder %s44, %s45
      %p59 = scmp.eq.s32.totalorder %s25, 1
      %p60 = por %p58, %p59
      %p62 = scmp.ne.s32.totalorder %s45, %s61
      %p63 = scmp.eq.s32.totalorder %s25, 0
      %p64 = por %p62, %p63
      %s66 = sadd.s32 %s65, 1
      %p69 = scmp.eq.s32.totalorder %s19, 1
      %p70 = scmp.ne.s32.totalorder %s65, %s67
      %p71 = scmp.eq.s32.totalorder %s19, 0
      %p72 = por %p70, %p71
      %p73 = scmp.ne.s32.totalorder %s65, %s67
      %p74 = scmp.eq.s32.totalorder %s24, 1
      %p75 = por %p73, %p74
      %p76 = scmp.ne.s32.totalorder %s67, %s68
      %p77 = scmp.eq.s32.totalorder %s24, 0
      %p78 = por %p76, %p77
      %p79 = scmp.ne.s32.totalorder %s67, %s68
      %p80 = scmp.eq.s32.totalorder %s25, 1
      %p81 = por %p79, %p80
      %p83 = scmp.ne.s32.totalorder %s68, %s82
      %p84 = scmp.eq.s32.totalorder %s25, 0
      %p85 = por %p83, %p84
      %s87 = sadd.s32 %s86, 1
      %p90 = scmp.eq.s32.totalorder %s19, 1
      %p91 = scmp.ne.s32.totalorder %s86, %s88
      %p92 = scmp.eq.s32.totalorder %s19, 0
      %p93 = por %p91, %p92
      %p94 = scmp.ne.s32.totalorder %s86, %s88
      %p95 = scmp.eq.s32.totalorder %s24, 1
      %p96 = por %p94, %p95
      %p97 = scmp.ne.s32.totalorder %s88, %s89
      %p98 = scmp.eq.s32.totalorder %s24, 0
      %p99 = por %p97, %p98
      %p100 = scmp.ne.s32.totalorder %s88, %s89
      %p101 = scmp.eq.s32.totalorder %s25, 1
      %p102 = por %p100, %p101
      %p104 = scmp.ne.s32.totalorder %s89, %s103
      %p105 = scmp.eq.s32.totalorder %s25, 0
      %p106 = por %p104, %p105
      %s107 = ssub.s32 %s27, %s34
      %p108 = scmp.eq.s32.totalorder %s107, 0
      %s110 = sadd.s32 %s109, 1
      %s111 = scalar_select %p108, %s109, %s110
      %p114 = pneg %p108
      %p115 = scmp.eq.s32.totalorder %s19, 1
      %p116 = por %p114, %p115
      %p117 = scmp.ne.s32.totalorder %s109, %s112
      %p118 = scmp.eq.s32.totalorder %s19, 0
      %p119 = por %p117, %p118
      %p120 = scmp.ne.s32.totalorder %s109, %s112
      %p121 = scmp.eq.s32.totalorder %s24, 1
      %p122 = por %p120, %p121
      %p123 = scmp.ne.s32.totalorder %s112, %s113
      %p124 = scmp.eq.s32.totalorder %s24, 0
      %p125 = por %p123, %p124
      %p126 = scmp.ne.s32.totalorder %s112, %s113
      %p127 = scmp.eq.s32.totalorder %s25, 1
      %p128 = por %p126, %p127
      %p130 = scmp.ne.s32.totalorder %s113, %s129
      %p131 = scmp.eq.s32.totalorder %s25, 0
      %p132 = por %p130, %p131
      %s133 = ssub.s32 %s27, %s34
      %p134 = scmp.eq.s32.totalorder %s133, 0
      %s136 = sadd.s32 %s135, 1
      %s137 = scalar_select %p134, %s135, %s136
      %p140 = pneg %p134
      %p141 = scmp.eq.s32.totalorder %s19, 1
      %p142 = por %p140, %p141
      %p143 = scmp.ne.s32.totalorder %s135, %s138
      %p144 = scmp.eq.s32.totalorder %s19, 0
      %p145 = por %p143, %p144
      %p146 = scmp.ne.s32.totalorder %s135, %s138
      %p147 = scmp.eq.s32.totalorder %s24, 1
      %p148 = por %p146, %p147
      %p149 = scmp.ne.s32.totalorder %s138, %s139
      %p150 = scmp.eq.s32.totalorder %s24, 0
      %p151 = por %p149, %p150
      %p152 = scmp.ne.s32.totalorder %s138, %s139
      %p153 = scmp.eq.s32.totalorder %s25, 1
      %p154 = por %p152, %p153
      %p156 = scmp.ne.s32.totalorder %s139, %s155
      %p157 = scmp.eq.s32.totalorder %s25, 0
      %p158 = por %p156, %p157
      %s159 = ssub.s32 %s26, %s38
      %s160 = ssub.s32 %s27, %s34
      %s161 = sor.u32 %s159, %s160
      %p162 = scmp.eq.s32.totalorder %s161, 0
      %s164 = sadd.s32 %s163, 1
      %s165 = scalar_select %p162, %s163, %s164
      %p168 = pneg %p162
      %p169 = scmp.eq.s32.totalorder %s19, 1
      %p170 = por %p168, %p169
      %p171 = scmp.ne.s32.totalorder %s163, %s166
      %p172 = scmp.eq.s32.totalorder %s19, 0
      %p173 = por %p171, %p172
      %p174 = scmp.ne.s32.totalorder %s163, %s166
      %p175 = scmp.eq.s32.totalorder %s24, 1
      %p176 = por %p174, %p175
      %p177 = scmp.ne.s32.totalorder %s166, %s167
      %p178 = scmp.eq.s32.totalorder %s24, 0
      %p179 = por %p177, %p178
      %p180 = scmp.ne.s32.totalorder %s166, %s167
      %p181 = scmp.eq.s32.totalorder %s25, 1
      %p182 = por %p180, %p181
      %p184 = scmp.ne.s32.totalorder %s167, %s183
      %p185 = scmp.eq.s32.totalorder %s25, 0
      %p186 = por %p184, %p185
      %p187 = scmp.le.s32.totalorder 1, %s19
      %p188 = scmp.lt.s32.totalorder %s19, 3
      %p189 = pnand %p187, %p188
      %p190 = pneg %p189
      // Predicated region
      $region9: #{tpu_custom_call.1} parent=5 // pred_check
        _
      $region10: #{tpu_custom_call.1} parent=5 // pred_check_branch
        %192 = sbr.rel (%p189) target = $region12
      $region11: #{tpu_custom_call.1} parent=5 // pred_region
        %s193 = ssub.s32 %s19, 1
        // Predicated region
        $region13: #{tpu_custom_call.1} parent=11 // pred_check
          %p194 = pneg %p78
        $region14: #{tpu_custom_call.1} parent=11 // pred_check_branch
          %196 = sbr.rel (%p194) target = $region16
        $region15: #{tpu_custom_call.1} parent=11 // pred_region
          %s198 = ssub.s32 512, 512
          %199 = vsyncadd [#allocation7], %s198
          %s200 = sshll.u32 [#allocation6], 4
          %s201 = int_to_ptr.vmem [resolvable:$true] %s200
          %206 = dma.hbm_to_vmem [thread:$0]  %s1, 512, %s201, [#allocation7], 128, 128, 8
        $region16: #{tpu_custom_call.1} parent=11 // pred_fallthru
          _
        // Predicated region
        $region17: #{tpu_custom_call.1} parent=11 // pred_check
          %p207 = pneg %p99
        $region18: #{tpu_custom_call.1} parent=11 // pred_check_branch
          %209 = sbr.rel (%p207) target = $region20
        $region19: #{tpu_custom_call.1} parent=11 // pred_region
          %s211 = ssub.s32 16, 16
          %212 = vsyncadd [#allocation7], %s211
          %s214 = sshll.u32 [#allocation8], 4
          %s215 = int_to_ptr.vmem [resolvable:$true] %s214
          %217 = dma.hbm_to_vmem [thread:$0]  %s2, 16, %s215, [#allocation7]
        $region20: #{tpu_custom_call.1} parent=11 // pred_fallthru
          _
        // Predicated region
        $region21: #{tpu_custom_call.1} parent=11 // pred_check
          %p218 = pneg %p125
        $region22: #{tpu_custom_call.1} parent=11 // pred_check_branch
          %220 = sbr.rel (%p218) target = $region24
        $region23: #{tpu_custom_call.1} parent=11 // pred_region
          %s222 = ssub.s32 2048, 2048
          %223 = vsyncadd [#allocation10], %s222
          %s224 = smul.addr %s29, 128
          %s225 = scalar_lea.hbm %s3, %s224
          %s226 = sshll.u32 [#allocation9], 4
          %s227 = int_to_ptr.vmem [resolvable:$true] %s226
          %232 = dma.hbm_to_vmem [thread:$0]  %s225, 2048, %s227, [#allocation10], 128, 128, 8
        $region24: #{tpu_custom_call.1} parent=11 // pred_fallthru
          _
        // Predicated region
        $region25: #{tpu_custom_call.1} parent=11 // pred_check
          %p233 = pneg %p151
        $region26: #{tpu_custom_call.1} parent=11 // pred_check_branch
          %235 = sbr.rel (%p233) target = $region28
        $region27: #{tpu_custom_call.1} parent=11 // pred_region
          %s237 = ssub.s32 16, 16
          %238 = vsyncadd [#allocation10], %s237
          %s239 = smul.addr %s29, 16
          %s240 = scalar_lea.hbm %s4, %s239
          %s242 = sshll.u32 [#allocation11], 4
          %s243 = int_to_ptr.vmem [resolvable:$true] %s242
          %245 = dma.hbm_to_vmem [thread:$0]  %s240, 16, %s243, [#allocation10]
        $region28: #{tpu_custom_call.1} parent=11 // pred_fallthru
          _
      $region12: #{tpu_custom_call.1} parent=5 // pred_fallthru
        _
      %p246 = scmp.lt.s32.totalorder %s19, 2
      // Predicated region
      $region29: #{tpu_custom_call.1} parent=5 // pred_check
        %p247 = pneg %p246
      $region30: #{tpu_custom_call.1} parent=5 // pred_check_branch
        %249 = sbr.rel (%p247) target = $region32
      $region31: #{tpu_custom_call.1} parent=5 // pred_region
        // Predicated region
        $region33: #{tpu_custom_call.1} parent=31 // pred_check
          %p250 = pneg %p51
        $region34: #{tpu_custom_call.1} parent=31 // pred_check_branch
          %252 = sbr.rel (%p250) target = $region36
        $region35: #{tpu_custom_call.1} parent=31 // pred_region
          %s253 = sand.u32 %s41, 1
          %s254 = scalar_lea.sflag [#allocation4], %s253
          %s255 = sand.u32 %s41, 1
          %s256 = smul.addr %s255, 8
          %s257 = scalar_lea.vmem [#allocation3], %s256
          %s259 = ssub.s32 128, 128
          %260 = vsyncadd %s254, %s259
          %s261 = smul.addr %s26, 128
          %s262 = scalar_lea.hbm %s0, %s261
          %s264 = sshll.u32 %s257, 4
          %s265 = int_to_ptr.vmem [resolvable:$true] %s264
          %267 = dma.hbm_to_vmem [thread:$0]  %s262, 128, %s265, %s254
        $region36: #{tpu_custom_call.1} parent=31 // pred_fallthru
          _
      $region32: #{tpu_custom_call.1} parent=5 // pred_fallthru
        _
      %p268 = scmp.le.s32.totalorder 1, %s19
      %p269 = scmp.lt.s32.totalorder %s19, 3
      %p270 = pnand %p268, %p269
      %p271 = pneg %p270
      // Predicated region
      $region37: #{tpu_custom_call.1} parent=5 // pred_check
        _
      $region38: #{tpu_custom_call.1} parent=5 // pred_check_branch
        %273 = sbr.rel (%p270) target = $region40
      $region39: #{tpu_custom_call.1} parent=5 // pred_region
        %s274 = ssub.s32 %s19, 1
        %s275 = sand.u32 %s44, 1
        %s276 = scalar_lea.sflag [#allocation4], %s275
        %s277 = sand.u32 %s44, 1
        %s278 = smul.addr %s277, 8
        %s279 = scalar_lea.vmem [#allocation3], %s278
        // Predicated region
        $region41: #{tpu_custom_call.1} parent=39 // pred_check
          %p280 = pneg %p57
        $region42: #{tpu_custom_call.1} parent=39 // pred_check_branch
          %282 = sbr.rel (%p280) target = $region44
        $region43: #{tpu_custom_call.1} parent=39 // pred_region
          %283 = dma.done %s276, 128
        $region44: #{tpu_custom_call.1} parent=39 // pred_fallthru
          _
        // Predicated region
        $region45: #{tpu_custom_call.1} parent=39 // pred_check
          %p284 = pneg %p78
        $region46: #{tpu_custom_call.1} parent=39 // pred_check_branch
          %286 = sbr.rel (%p284) target = $region48
        $region47: #{tpu_custom_call.1} parent=39 // pred_region
          %287 = dma.done [#allocation7], 512
        $region48: #{tpu_custom_call.1} parent=39 // pred_fallthru
          _
        // Predicated region
        $region49: #{tpu_custom_call.1} parent=39 // pred_check
          %p288 = pneg %p99
        $region50: #{tpu_custom_call.1} parent=39 // pred_check_branch
          %290 = sbr.rel (%p288) target = $region52
        $region51: #{tpu_custom_call.1} parent=39 // pred_region
          %291 = dma.done [#allocation7], 16
        $region52: #{tpu_custom_call.1} parent=39 // pred_fallthru
          _
        // Predicated region
        $region53: #{tpu_custom_call.1} parent=39 // pred_check
          %p292 = pneg %p125
        $region54: #{tpu_custom_call.1} parent=39 // pred_check_branch
          %294 = sbr.rel (%p292) target = $region56
        $region55: #{tpu_custom_call.1} parent=39 // pred_region
          %295 = dma.done [#allocation10], 2048
        $region56: #{tpu_custom_call.1} parent=39 // pred_fallthru
          _
        // Predicated region
        $region57: #{tpu_custom_call.1} parent=39 // pred_check
          %p296 = pneg %p151
        $region58: #{tpu_custom_call.1} parent=39 // pred_check_branch
          %298 = sbr.rel (%p296) target = $region60
        $region59: #{tpu_custom_call.1} parent=39 // pred_region
          %299 = dma.done [#allocation10], 16
        $region60: #{tpu_custom_call.1} parent=39 // pred_fallthru
          _
        %s300 = sand.u32 %s44, 1
        %s301 = scalar_lea.sflag [#allocation4], %s300
        %s302 = sand.u32 %s44, 1
        %s303 = smul.addr %s302, 8
        %s304 = scalar_lea.vmem [#allocation3], %s303
        %p305 = pneg %p57
        %p306 = pneg %p54
        %p307 = pneg %p78
        %p308 = pneg %p75
        %p309 = pneg %p99
        %p310 = pneg %p96
        %p311 = pneg %p125
        %p312 = pneg %p122
        %p313 = pneg %p151
        %p314 = pneg %p148
        %p315 = pneg %p179
        %p316 = pneg %p176
        %s317 = sand.u32 %s166, 1
        %s318 = scalar_lea.sflag [#allocation5], %s317
        %s319 = sand.u32 %s166, 1
        %s320 = smul.addr %s319, 8
        %s321 = scalar_lea.vmem [#allocation12], %s320
        %p322 = scmp.eq.s32.totalorder %s29, 0
        // Predicated region
        $region61: #{tpu_custom_call.1} parent=39 // pred_check
          %p323 = pneg %p322
        $region62: #{tpu_custom_call.1} parent=39 // pred_check_branch
          %325 = sbr.rel (%p323) target = $region64
        $region63: #{tpu_custom_call.1} parent=39 // pred_region
          %v326 = vld [vmem:[%s279] sm:$0xff]
          %v327 = vld [vmem:[#allocation6] sm:$0xff]
          %v328 = vld [vmem:[#allocation6 + $0x8] sm:$0xff]
          %v329 = vld [vmem:[#allocation6 + $0x10] sm:$0xff]
          %v330 = vld [vmem:[#allocation6 + $0x18] sm:$0xff]
          %v331 = vld [vmem:[#allocation8] sm:$0x1]
          %v333 = vlaneseq
          %v334 = vshrl.u32 %v333, 7
          %v335 = vsub.s32 0, %v334
          %v336 = vrot.slane %v331, %v335
          %vm338 = vcmask 261120
          %v340 = vsel %vm338, %v326, 0
          %342 = vmatprep.subr.mxu0 0.0
          %343 = vmatpush1.msra.mxu0 %v327
          %344 = vmatprep.subr.mxu0 0.0
          %345 = vmatpush1.msra.mxu0 %v328
          %346 = vmatprep.subr.mxu0 0.0
          %347 = vmatpush1.msra.mxu0 %v329
          %348 = vmatprep.subr.mxu0 0.0
          %349 = vmatpush1.msra.mxu0 %v330
          %350 = vmatprep.subr.mxu0 0.0
          %351 = vmatpush1.msra.mxu0 0.0
          %352 = vmatprep.subr.mxu0 0.0
          %353 = vmatpush1.msra.mxu0 0.0
          %354 = vmatprep.subr.mxu0 0.0
          %355 = vmatpush1.msra.mxu0 0.0
          %356 = vmatprep.subr.mxu0 0.0
          %357 = vmatpush1.msra.mxu0 0.0
          %358 = vmatprep.subr.mxu0 0.0
          %359 = vmatpush1.msra.mxu0 0.0
          %360 = vmatprep.subr.mxu0 0.0
          %361 = vmatpush1.msra.mxu0 0.0
          %362 = vmatprep.subr.mxu0 0.0
          %363 = vmatpush1.msra.mxu0 0.0
          %364 = vmatprep.subr.mxu0 0.0
          %365 = vmatpush1.msra.mxu0 0.0
          %366 = vmatprep.subr.mxu0 0.0
          %367 = vmatpush1.msra.mxu0 0.0
          %368 = vmatprep.subr.mxu0 0.0
          %369 = vmatpush1.msra.mxu0 0.0
          %370 = vmatprep.subr.mxu0 0.0
          %371 = vmatpush1.msra.mxu0 0.0
          %372 = vmatprep.subr.mxu0 0.0
          %373 = vmatpush1.msra.mxu0 0.0
          %374 = vmatprep.subr.mxu0 0.0
          %375 = vmatpush1.msra.mxu0 0.0
          %376 = vmatprep.subr.mxu0 0.0
          %377 = vmatpush1.msra.mxu0 0.0
          %378 = vmatprep.subr.mxu0 0.0
          %379 = vmatpush1.msra.mxu0 0.0
          %380 = vmatprep.subr.mxu0 0.0
          %381 = vmatpush1.msra.mxu0 0.0
          %382 = vmatprep.subr.mxu0 0.0
          %383 = vmatpush1.msra.mxu0 0.0
          %384 = vmatprep.subr.mxu0 0.0
          %385 = vmatpush1.msra.mxu0 0.0
          %386 = vmatprep.subr.mxu0 0.0
          %387 = vmatpush1.msra.mxu0 0.0
          %388 = vmatprep.subr.mxu0 0.0
          %389 = vmatpush1.msra.mxu0 0.0
          %390 = vmatprep.subr.mxu0 0.0
          %391 = vmatpush1.msra.mxu0 0.0
          %392 = vmatprep.subr.mxu0 0.0
          %393 = vmatpush1.msra.mxu0 0.0
          %394 = vmatprep.subr.mxu0 0.0
          %395 = vmatpush1.msra.mxu0 0.0
          %396 = vmatprep.subr.mxu0 0.0
          %397 = vmatpush1.msra.mxu0 0.0
          %398 = vmatprep.subr.mxu0 0.0
          %399 = vmatpush1.msra.mxu0 0.0
          %400 = vmatprep.subr.mxu0 0.0
          %401 = vmatpush1.msra.mxu0 0.0
          %402 = vmatprep.subr.mxu0 0.0
          %403 = vmatpush1.msra.mxu0 0.0
          %404 = vmatprep.subr.mxu0 0.0
          %405 = vmatpush1.msra.mxu0 0.0
          %406 = vmatprep.mubr.f32.mxu0 0.0
          %407 = vmatmul.mubr.f32.gmra.mrb[0].mxu0 %v340
          %v408 = vpop.f32.mrb[0].mxu0
          %v409 = vadd.f32 %v336, %v408
          %v410 = vpop.f32.mrb[0].mxu0
          %411 = vdwg.mxu0
          %412 = vst [vmem:[#allocation2] sm:$0xff] %v409
        $region64: #{tpu_custom_call.1} parent=39 // pred_fallthru
          _
        %v413 = vld [vmem:[#allocation2] sm:$0xff]
        %v414 = vld [vmem:[#allocation9] sm:$0xff]
        %v415 = vld [vmem:[#allocation9 + $0x8] sm:$0xff]
        %v416 = vld [vmem:[#allocation9 + $0x10] sm:$0xff]
        %v417 = vld [vmem:[#allocation9 + $0x18] sm:$0xff]
        %v418 = vld [vmem:[#allocation9 + $0x20] sm:$0xff]
        %v419 = vld [vmem:[#allocation9 + $0x28] sm:$0xff]
        %v420 = vld [vmem:[#allocation9 + $0x30] sm:$0xff]
        %v421 = vld [vmem:[#allocation9 + $0x38] sm:$0xff]
        %v422 = vld [vmem:[#allocation9 + $0x40] sm:$0xff]
        %v423 = vld [vmem:[#allocation9 + $0x48] sm:$0xff]
        %v424 = vld [vmem:[#allocation9 + $0x50] sm:$0xff]
        %v425 = vld [vmem:[#allocation9 + $0x58] sm:$0xff]
        %v426 = vld [vmem:[#allocation9 + $0x60] sm:$0xff]
        %v427 = vld [vmem:[#allocation9 + $0x68] sm:$0xff]
        %v428 = vld [vmem:[#allocation9 + $0x70] sm:$0xff]
        %v429 = vld [vmem:[#allocation9 + $0x78] sm:$0xff]
        %v430 = vld [vmem:[#allocation11] sm:$0x1]
        %v432 = vlaneseq
        %v433 = vshrl.u32 %v432, 7
        %v434 = vsub.s32 0, %v433
        %v435 = vrot.slane %v430, %v434
        %437 = vmatprep.subr.mxu0 0.0
        %438 = vmatpush1.msra.mxu0 %v414
        %439 = vmatprep.subr.mxu0 0.0
        %440 = vmatpush1.msra.mxu0 %v415
        %441 = vmatprep.subr.mxu0 0.0
        %442 = vmatpush1.msra.mxu0 %v416
        %443 = vmatprep.subr.mxu0 0.0
        %444 = vmatpush1.msra.mxu0 %v417
        %445 = vmatprep.subr.mxu0 0.0
        %446 = vmatpush1.msra.mxu0 %v418
        %447 = vmatprep.subr.mxu0 0.0
        %448 = vmatpush1.msra.mxu0 %v419
        %449 = vmatprep.subr.mxu0 0.0
        %450 = vmatpush1.msra.mxu0 %v420
        %451 = vmatprep.subr.mxu0 0.0
        %452 = vmatpush1.msra.mxu0 %v421
        %453 = vmatprep.subr.mxu0 0.0
        %454 = vmatpush1.msra.mxu0 %v422
        %455 = vmatprep.subr.mxu0 0.0
        %456 = vmatpush1.msra.mxu0 %v423
        %457 = vmatprep.subr.mxu0 0.0
        %458 = vmatpush1.msra.mxu0 %v424
        %459 = vmatprep.subr.mxu0 0.0
        %460 = vmatpush1.msra.mxu0 %v425
        %461 = vmatprep.subr.mxu0 0.0
        %462 = vmatpush1.msra.mxu0 %v426
        %463 = vmatprep.subr.mxu0 0.0
        %464 = vmatpush1.msra.mxu0 %v427
        %465 = vmatprep.subr.mxu0 0.0
        %466 = vmatpush1.msra.mxu0 %v428
        %467 = vmatprep.subr.mxu0 0.0
        %468 = vmatpush1.msra.mxu0 %v429
        %469 = vmatprep.subr.mxu0 0.0
        %470 = vmatpush1.msra.mxu0 0.0
        %471 = vmatprep.subr.mxu0 0.0
        %472 = vmatpush1.msra.mxu0 0.0
        %473 = vmatprep.subr.mxu0 0.0
        %474 = vmatpush1.msra.mxu0 0.0
        %475 = vmatprep.subr.mxu0 0.0
        %476 = vmatpush1.msra.mxu0 0.0
        %477 = vmatprep.subr.mxu0 0.0
        %478 = vmatpush1.msra.mxu0 0.0
        %479 = vmatprep.subr.mxu0 0.0
        %480 = vmatpush1.msra.mxu0 0.0
        %481 = vmatprep.subr.mxu0 0.0
        %482 = vmatpush1.msra.mxu0 0.0
        %483 = vmatprep.subr.mxu0 0.0
        %484 = vmatpush1.msra.mxu0 0.0
        %485 = vmatprep.subr.mxu0 0.0
        %486 = vmatpush1.msra.mxu0 0.0
        %487 = vmatprep.subr.mxu0 0.0
        %488 = vmatpush1.msra.mxu0 0.0
        %489 = vmatprep.subr.mxu0 0.0
        %490 = vmatpush1.msra.mxu0 0.0
        %491 = vmatprep.subr.mxu0 0.0
        %492 = vmatpush1.msra.mxu0 0.0
        %493 = vmatprep.subr.mxu0 0.0
        %494 = vmatpush1.msra.mxu0 0.0
        %495 = vmatprep.subr.mxu0 0.0
        %496 = vmatpush1.msra.mxu0 0.0
        %497 = vmatprep.subr.mxu0 0.0
        %498 = vmatpush1.msra.mxu0 0.0
        %499 = vmatprep.subr.mxu0 0.0
        %500 = vmatpush1.msra.mxu0 0.0
        %501 = vmatprep.mubr.f32.mxu0 0.0
        %502 = vmatmul.mubr.f32.gmra.mrb[0].mxu0 %v413
        %v503 = vpop.f32.mrb[0].mxu0
        %v504 = vadd.f32 %v435, %v503
        %v505 = vpop.f32.mrb[0].mxu0
        %506 = vdwg.mxu0
        %507 = vst [vmem:[%s321] sm:$0xff] %v504
        %s508 = sand.u32 %s166, 1
        %s509 = scalar_lea.sflag [#allocation5], %s508
        %s510 = sand.u32 %s166, 1
        %s511 = smul.addr %s510, 8
        %s512 = scalar_lea.vmem [#allocation12], %s511
        // Predicated region
        $region65: #{tpu_custom_call.1} parent=39 // pred_check
          %p513 = pneg %p176
        $region66: #{tpu_custom_call.1} parent=39 // pred_check_branch
          %515 = sbr.rel (%p513) target = $region68
        $region67: #{tpu_custom_call.1} parent=39 // pred_region
          %s517 = ssub.s32 128, 128
          %518 = vsyncadd %s509, %s517
          %s519 = sadd.s32 %s29, %s28
          %s520 = smul.addr %s519, 128
          %s521 = scalar_lea.hbm %s5, %s520
          %s523 = sshll.u32 %s512, 4
          %s524 = int_to_ptr.vmem [resolvable:$true] %s523
          %526 = dma.vmem_to_hbm [thread:$0]  %s524, 128, %s521, %s509
        $region68: #{tpu_custom_call.1} parent=39 // pred_fallthru
          _
      $region40: #{tpu_custom_call.1} parent=5 // pred_fallthru
        _
      %p527 = scmp.le.s32.totalorder 2, %s19
      // Predicated region
      $region69: #{tpu_custom_call.1} parent=5 // pred_check
        %p528 = pneg %p527
      $region70: #{tpu_custom_call.1} parent=5 // pred_check_branch
        %530 = sbr.rel (%p528) target = $region72
      $region71: #{tpu_custom_call.1} parent=5 // pred_region
        %s531 = ssub.s32 %s19, 2
        // Predicated region
        $region73: #{tpu_custom_call.1} parent=71 // pred_check
          %p532 = pneg %p182
        $region74: #{tpu_custom_call.1} parent=71 // pred_check_branch
          %534 = sbr.rel (%p532) target = $region76
        $region75: #{tpu_custom_call.1} parent=71 // pred_region
          %s535 = sand.u32 %s167, 1
          %s536 = scalar_lea.sflag [#allocation5], %s535
          %s537 = sand.u32 %s167, 1
          %s538 = smul.addr %s537, 8
          %s539 = scalar_lea.vmem [#allocation12], %s538
          %540 = dma.done %s536, 128
        $region76: #{tpu_custom_call.1} parent=71 // pred_fallthru
          _
      $region72: #{tpu_custom_call.1} parent=5 // pred_fallthru
        _
    $region6: #{tpu_custom_call.1} parent=1 // loop_footer
      %s23 = sadd.s32 1, %s19
    $region7: #{tpu_custom_call.1} parent=1 // loop_footer_branch
      %18 = sbr.rel target = $region3
    $region8: #{tpu_custom_call.1} parent=1 // loop_exit
      _
    %541 = vsyncpa [#allocation4], 1
    %s542 = scalar_lea.sflag [#allocation4], 1
    %543 = vsyncpa %s542, 1
    %544 = vsyncpa [#allocation7], 1
    %545 = vsyncpa [#allocation10], 1
    %546 = vsyncpa [#allocation5], 1
    %s547 = scalar_lea.sflag [#allocation5], 1
    %548 = vsyncpa %s547, 1

</llo_original>
